<compile_context>
chip_gen: v5e
topology: v5e:2x2
jax: 0.10.0
libtpu: 0.0.40
codegen_flags: <defaults>
</compile_context>

<pallas_src>
import jax
import jax.numpy as jnp
from jax.experimental import pallas as pl
from jax.experimental.pallas import tpu as pltpu

_LANE = 128      # TPU vreg lane width (batch maps here in the transposed layout)
_SUBLANE = 8     # f32 sublane count


def _round_up(n, m):
    return (n + m - 1) // m * m


def _cdiv(a, b):
    return -(-a // b)


def pg_kernel(xT_ref, w1_ref, b1_ref, w2_ref, b2_ref, o_ref):
    # h^T = relu(W1 @ x^T + b1): (H_pad, S) @ (S, TILE_B) -> (H_pad, TILE_B),
    # bf16 operands, f32 MXU accumulation, f32 bias add.
    h = jnp.dot(w1_ref[...], xT_ref[...], preferred_element_type=jnp.float32)
    h = jnp.maximum(h + b1_ref[...], 0.0)
    # out^T = W2 @ h^T + b2: (A_pad, H_pad) @ (H_pad, TILE_B) -> (A_pad, TILE_B).
    out = jnp.dot(w2_ref[...], h.astype(w2_ref.dtype),
                  preferred_element_type=jnp.float32)
    o_ref[...] = (out + b2_ref[...]).astype(o_ref.dtype)


def prepare_params(w1, b1, w2, b2, *, compute_dtype=jnp.bfloat16):
    """One-time parameter prep.  Inputs use PyTorch nn.Linear layout:
    w1: (H, S), b1: (H,), w2: (A, H), b2: (A,).  Pads the hidden dim to a
    packing-friendly multiple and the action dim to 8 sublanes; casts weights
    to the matmul compute dtype (biases stay f32)."""
    H, S = w1.shape
    A = w2.shape[0]
    b1 = jnp.reshape(b1, (-1,))
    b2 = jnp.reshape(b2, (-1,))

    H_pad = _round_up(H, 32)          # friendly for bf16 sublane packing
    A_pad = _round_up(A, _SUBLANE)    # output sublane dim; extra rows are zero

    w1p = jnp.zeros((H_pad, S), compute_dtype).at[:H, :].set(w1.astype(compute_dtype))
    b1p = jnp.zeros((H_pad, 1), jnp.float32).at[:H, 0].set(b1.astype(jnp.float32))
    w2p = jnp.zeros((A_pad, H_pad), compute_dtype).at[:A, :H].set(w2.astype(compute_dtype))
    b2p = jnp.zeros((A_pad, 1), jnp.float32).at[:A, 0].set(b2.astype(jnp.float32))

    return dict(w1p=w1p, b1p=b1p, w2p=w2p, b2p=b2p,
                S=S, H=H, A=A, H_pad=H_pad, A_pad=A_pad)


def pg_forward(x, params, *, tile_b=2048):
    """x: (B, state_dim) f32.  Returns (B, action_dim) f32 logits, matching
    relu(x @ W1^T + b1) @ W2^T + b2 (PyTorch PGNetwork.forward)."""
    B, S = x.shape
    assert S == params["S"], "state_dim mismatch with prepared params"
    A, A_pad, H_pad = params["A"], params["A_pad"], params["H_pad"]
    w1p, b1p = params["w1p"], params["b1p"]
    w2p, b2p = params["w2p"], params["b2p"]
    cdtype = w1p.dtype

    # --- batch tiling from step count; >=2 steps when possible (v7x megacore)
    steps = max(1, _cdiv(B, tile_b))
    if steps == 1 and B > _LANE:
        steps = 2
    TILE_B = _round_up(_cdiv(B, steps), _LANE)
    steps = _cdiv(B, TILE_B)
    B_pad = steps * TILE_B

    # --- transposed, lane-dense activations: batch on the 128-lane axis -----
    xT = jnp.zeros((S, B_pad), cdtype).at[:, :B].set(x.T.astype(cdtype))

    # --- advisory cost for XLA scheduling ------------------------------------
    itemsize = jnp.dtype(cdtype).itemsize
    flops = 2 * B_pad * (S * H_pad + H_pad * A_pad)
    bytes_accessed = (S * B_pad * itemsize                       # x^T in
                      + (w1p.size + w2p.size) * itemsize          # weights
                      + (b1p.size + b2p.size) * 4                 # biases (f32)
                      + A_pad * B_pad * 4)                        # out^T (f32)

    outT = pl.pallas_call(
        pg_kernel,
        out_shape=jax.ShapeDtypeStruct((A_pad, B_pad), jnp.float32),
        grid=(steps,),
        in_specs=[
            # Batch-tiled, lane-dense activation stream.
            pl.BlockSpec((S, TILE_B), lambda i: (0, i)),
            # Grid-invariant parameters: constant index maps -> resident in VMEM.
            pl.BlockSpec((H_pad, S), lambda i: (0, 0)),
            pl.BlockSpec((H_pad, 1), lambda i: (0, 0)),
            pl.BlockSpec((A_pad, H_pad), lambda i: (0, 0)),
            pl.BlockSpec((A_pad, 1), lambda i: (0, 0)),
        ],
        out_specs=pl.BlockSpec((A_pad, TILE_B), lambda i: (0, i)),
        compiler_params=pltpu.CompilerParams(
            dimension_semantics=("parallel",),   # shard batch grid across TCs (v7x)
        ),
        cost_estimate=pl.CostEstimate(
            flops=flops, transcendentals=0, bytes_accessed=bytes_accessed),
    )(xT, w1p, b1p, w2p, b2p)

    return outT[:A, :B].T


def init_params(key, state_dim, action_dim, hidden=20):
    # Mirrors PGNetwork.initialize_weights(): weight ~ N(0, 0.1), bias = 0.01.
    # PyTorch nn.Linear layout: weight (out_features, in_features).
    k1, k2 = jax.random.split(key)
    w1 = jax.random.normal(k1, (hidden, state_dim), jnp.float32) * 0.1
    b1 = jnp.full((hidden,), 0.01, jnp.float32)
    w2 = jax.random.normal(k2, (action_dim, hidden), jnp.float32) * 0.1
    b2 = jnp.full((action_dim,), 0.01, jnp.float32)
    return w1, b1, w2, b2


if __name__ == "__main__":
    state_dim, action_dim, batch = 4, 2, 2

    key = jax.random.PRNGKey(0)
    kx, kp = jax.random.split(key)
    x = jax.random.normal(kx, (batch, state_dim), jnp.float32)
    w1, b1, w2, b2 = init_params(kp, state_dim, action_dim)
    params = prepare_params(w1, b1, w2, b2)   # one-time pad + bf16 cast

    out = pg_forward(x, params)
    jax.block_until_ready(out)

    # Reference in plain JAX f32 (same semantics as the PyTorch forward).
    # bf16 matmul inputs with f32 accumulation -> relaxed tolerance.
    ref = jnp.maximum(x @ w1.T + b1, 0.0) @ w2.T + b2
    assert out.shape == (batch, action_dim)
    assert jnp.allclose(out, ref, atol=2e-2, rtol=2e-2), (out, ref)

    # Multi-tile batch: exercises the grid / padding / megacore split path.
    big_x = jax.random.normal(kx, (1030, state_dim), jnp.float32)
    big_out = pg_forward(big_x, params, tile_b=512)
    jax.block_until_ready(big_out)
    big_ref = jnp.maximum(big_x @ w1.T + b1, 0.0) @ w2.T + b2
    assert big_out.shape == (1030, action_dim)
    assert jnp.allclose(big_out, big_ref, atol=2e-2, rtol=2e-2)

    print("KERNEL_OK")
</pallas_src>

<mosaic_0001>
module attributes {stable_mosaic.version = 11 : i64} {
  func.func @pg_kernel(%arg0: i32, %arg1: memref<4x128xbf16, #tpu.memory_space<vmem>>, %arg2: memref<32x4xbf16, #tpu.memory_space<vmem>>, %arg3: memref<32x1xf32, #tpu.memory_space<vmem>>, %arg4: memref<8x32xbf16, #tpu.memory_space<vmem>>, %arg5: memref<8x1xf32, #tpu.memory_space<vmem>>, %arg6: memref<8x128xf32, #tpu.memory_space<vmem>>) attributes {dimension_semantics = [#tpu.dimension_semantics<parallel>], iteration_bounds = array<i64: 1>, scalar_prefetch = 0 : i64, scratch_operands = 0 : i64, tpu.core_type = #tpu.core_type<tc>, window_params = [{transform_indices = @transform_0, window_bounds = array<i64: 4, 128>}, {pipeline_mode = #tpu.pipeline_mode<synchronous>, transform_indices = @transform_1, window_bounds = array<i64: 32, 4>}, {pipeline_mode = #tpu.pipeline_mode<synchronous>, transform_indices = @transform_2, window_bounds = array<i64: 32, 1>}, {pipeline_mode = #tpu.pipeline_mode<synchronous>, transform_indices = @transform_3, window_bounds = array<i64: 8, 32>}, {pipeline_mode = #tpu.pipeline_mode<synchronous>, transform_indices = @transform_4, window_bounds = array<i64: 8, 1>}, {transform_indices = @transform_5, window_bounds = array<i64: 8, 128>}]} {
    %c0 = arith.constant 0 : index
    %c0_0 = arith.constant 0 : index
    %0 = vector.load %arg2[%c0, %c0_0] : memref<32x4xbf16, #tpu.memory_space<vmem>>, vector<32x4xbf16>
    %c0_1 = arith.constant 0 : index
    %c0_2 = arith.constant 0 : index
    %1 = vector.load %arg1[%c0_1, %c0_2] : memref<4x128xbf16, #tpu.memory_space<vmem>>, vector<4x128xbf16>
    %cst = arith.constant dense<0.000000e+00> : vector<32x128xf32>
    %2 = tpu.matmul %0, %1, %cst {dimension_numbers = #tpu.dot_dimension_numbers<[1], [0], [0], [1], [0, 0, 1, 1], [], []>} : vector<32x4xbf16>, vector<4x128xbf16>, vector<32x128xf32> -> vector<32x128xf32>
    %c0_3 = arith.constant 0 : index
    %c0_4 = arith.constant 0 : index
    %3 = vector.load %arg3[%c0_3, %c0_4] : memref<32x1xf32, #tpu.memory_space<vmem>>, vector<32x1xf32>
    %4 = vector.broadcast %3 : vector<32x1xf32> to vector<32x128xf32>
    %5 = arith.addf %2, %4 : vector<32x128xf32>
    %cst_5 = arith.constant 0.000000e+00 : f32
    %6 = vector.broadcast %cst_5 : f32 to vector<32x128xf32>
    %7 = arith.maximumf %5, %6 : vector<32x128xf32>
    %c0_6 = arith.constant 0 : index
    %c0_7 = arith.constant 0 : index
    %8 = vector.load %arg4[%c0_6, %c0_7] : memref<8x32xbf16, #tpu.memory_space<vmem>>, vector<8x32xbf16>
    %9 = arith.truncf %7 : vector<32x128xf32> to vector<32x128xbf16>
    %cst_8 = arith.constant dense<0.000000e+00> : vector<8x128xf32>
    %10 = tpu.matmul %8, %9, %cst_8 {dimension_numbers = #tpu.dot_dimension_numbers<[1], [0], [0], [1], [0, 0, 1, 1], [], []>} : vector<8x32xbf16>, vector<32x128xbf16>, vector<8x128xf32> -> vector<8x128xf32>
    %c0_9 = arith.constant 0 : index
    %c0_10 = arith.constant 0 : index
    %11 = vector.load %arg5[%c0_9, %c0_10] : memref<8x1xf32, #tpu.memory_space<vmem>>, vector<8x1xf32>
    %12 = vector.broadcast %11 : vector<8x1xf32> to vector<8x128xf32>
    %13 = arith.addf %10, %12 : vector<8x128xf32>
    %c0_11 = arith.constant 0 : index
    %c0_12 = arith.constant 0 : index
    %14 = vector.load %arg6[%c0_11, %c0_12] : memref<8x128xf32, #tpu.memory_space<vmem>>, vector<8x128xf32>
    tpu.vector_store %arg6[%c0_11, %c0_12], %13 {strides = array<i32>} : memref<8x128xf32, #tpu.memory_space<vmem>>, vector<8x128xf32>,
    return
  }
  func.func @transform_0(%arg0: i32) -> (i32, i32) {
    %c0_i32 = arith.constant 0 : i32
    %c0_i32_0 = arith.constant 0 : i32
    return %c0_i32, %arg0 : i32, i32
  }
  func.func @transform_1(%arg0: i32) -> (i32, i32) {
    %c0_i32 = arith.constant 0 : i32
    %c0_i32_0 = arith.constant 0 : i32
    %c0_i32_1 = arith.constant 0 : i32
    return %c0_i32, %c0_i32_0 : i32, i32
  }
  func.func @transform_2(%arg0: i32) -> (i32, i32) {
    %c0_i32 = arith.constant 0 : i32
    %c0_i32_0 = arith.constant 0 : i32
    %c0_i32_1 = arith.constant 0 : i32
    return %c0_i32, %c0_i32_0 : i32, i32
  }
  func.func @transform_3(%arg0: i32) -> (i32, i32) {
    %c0_i32 = arith.constant 0 : i32
    %c0_i32_0 = arith.constant 0 : i32
    %c0_i32_1 = arith.constant 0 : i32
    return %c0_i32, %c0_i32_0 : i32, i32
  }
  func.func @transform_4(%arg0: i32) -> (i32, i32) {
    %c0_i32 = arith.constant 0 : i32
    %c0_i32_0 = arith.constant 0 : i32
    %c0_i32_1 = arith.constant 0 : i32
    return %c0_i32, %c0_i32_0 : i32, i32
  }
  func.func @transform_5(%arg0: i32) -> (i32, i32) {
    %c0_i32 = arith.constant 0 : i32
    %c0_i32_0 = arith.constant 0 : i32
    return %c0_i32, %arg0 : i32, i32
  }
}

</mosaic_0001>

<llo_original>
// kernel: tpu_custom_call.1
$region0: #{tpu_custom_call.1}
  #allocation0 [shape = 'u32[]', space=smem, size = 0x4, offset = 0x4, fixed_abs, tag = 'smem constant byte address 0x4 - core index']
  #allocation1 [shape = 'u32[72,128]{1,0:T(1,128)}', space=vmem, size = 0x9000, scoped, tag = 'internal scratch']
  %s0 = inlined_call_operand.vmem [shape: bf16[4,128], index: 0, kind: input, shape index: {}]
  %s1 = inlined_call_operand.vmem [shape: bf16[32,4], index: 1, kind: input, shape index: {}]
  %s2 = inlined_call_operand.vmem [shape: f32[32,1], index: 2, kind: input, shape index: {}]
  %s3 = inlined_call_operand.vmem [shape: bf16[8,32], index: 3, kind: input, shape index: {}]
  %s4 = inlined_call_operand.vmem [shape: f32[8,1], index: 4, kind: input, shape index: {}]
  %s5 = inlined_call_operand.hbm [shape: f32[8,128], index: 5, kind: output, shape index: {}]
  %s6 = sld [smem:[#allocation0]]
  $region30: #{tpu_custom_call.1} parent=0
    _
  %s8 = ssub.s32 1, %s6
  %s9 = scalar_select 0, %s8, %s6
  $region1: #{tpu_custom_call.1} parent=0
    #allocation2 [shape = 'u8[4096]{0}', space=vmem, size = 0x1000, scoped, tag = 'output window, operand 0, single buffered']
    #allocation3 [shape = 's32[1]{0}', space=sflag, size = 0x4, scoped, tag = 'scoped memory for tpu_custom_call.1']
    %10 = vsyncpa [#allocation3], 0
    // Predicated region
    $region2: #{tpu_custom_call.1} parent=1 // pred_check
      _
    $region3: #{tpu_custom_call.1} parent=1 // pred_check_branch
      %12 = sbr.rel (0) target = $region5
    $region4: #{tpu_custom_call.1} parent=1 // pred_region
      _
    $region5: #{tpu_custom_call.1} parent=1 // pred_fallthru
      _
    // Predicated region
    $region6: #{tpu_custom_call.1} parent=1 // pred_check
      _
    $region7: #{tpu_custom_call.1} parent=1 // pred_check_branch
      %14 = sbr.rel (0) target = $region9
    $region8: #{tpu_custom_call.1} parent=1 // pred_region
      _
    $region9: #{tpu_custom_call.1} parent=1 // pred_fallthru
      _
    // Predicated region
    $region10: #{tpu_custom_call.1} parent=1 // pred_check
      _
    $region11: #{tpu_custom_call.1} parent=1 // pred_check_branch
      %16 = sbr.rel (0) target = $region13
    $region12: #{tpu_custom_call.1} parent=1 // pred_region
      _
    $region13: #{tpu_custom_call.1} parent=1 // pred_fallthru
      _
    // Predicated region
    $region14: #{tpu_custom_call.1} parent=1 // pred_check
      _
    $region15: #{tpu_custom_call.1} parent=1 // pred_check_branch
      %18 = sbr.rel (0) target = $region17
    $region16: #{tpu_custom_call.1} parent=1 // pred_region
      _
    $region17: #{tpu_custom_call.1} parent=1 // pred_fallthru
      _
    // Predicated region
    $region18: #{tpu_custom_call.1} parent=1 // pred_check
      _
    $region19: #{tpu_custom_call.1} parent=1 // pred_check_branch
      %20 = sbr.rel (0) target = $region21
    $region20: #{tpu_custom_call.1} parent=1 // pred_region
      _
    $region21: #{tpu_custom_call.1} parent=1 // pred_fallthru
      _
    %v22 = vld [vmem:[%s1] sm:$0xf]
    %v23 = vld [vmem:[%s1 + $0x4] sm:$0xf]
    %v24 = vld [vmem:[%s1 + $0x8] sm:$0xf]
    %v25 = vld [vmem:[%s1 + $0xc] sm:$0xf]
    %v26 = vld [vmem:[%s0] sm:$0x3]
    %v27 = vld [vmem:[%s2] sm:$0xff]
    %v28 = vld [vmem:[%s2 + $0x8] sm:$0xff]
    %v29 = vld [vmem:[%s2 + $0x10] sm:$0xff]
    %v30 = vld [vmem:[%s2 + $0x18] sm:$0xff]
    %32 = vset.pattern.permute.xlu0 0
    %33 = vperm.xlu0 %32, %v27
    %v34 = vpop.permute.xlu0 %33
    %37 = vset.pattern.permute.xlu0 0
    %38 = vperm.xlu0 %37, %v28
    %v39 = vpop.permute.xlu0 %38
    %42 = vset.pattern.permute.xlu0 0
    %43 = vperm.xlu0 %42, %v29
    %v44 = vpop.permute.xlu0 %43
    %47 = vset.pattern.permute.xlu0 0
    %48 = vperm.xlu0 %47, %v30
    %v49 = vpop.permute.xlu0 %48
    %v55 = vunpack.c.l.b16 %v22
    %v56 = vunpack.c.l.b16 %v23
    %v57 = vunpack.c.l.b16 %v24
    %v58 = vunpack.c.l.b16 %v25
    %v59 = vpack.c.b16 %v56, %v55
    %v60 = vpack.c.b16 %v58, %v57
    %vm61 = vcmask 31744
    %v63 = vsel %vm61, %v59, 0
    %v66 = vsel %vm61, %v60, 0
    %vm68 = vcmask 1041408
    %v70 = vsel %vm68, %v26, 0
    %72 = vmatpush.bf16.msra.mxu0 0
    %73 = vmatpush.bf16.msra.mxu0 0
    %74 = vmatpush.bf16.msra.mxu0 0
    %75 = vmatpush.bf16.msra.mxu0 0
    %76 = vmatpush.bf16.msra.mxu0 0
    %77 = vmatpush.bf16.msra.mxu0 0
    %78 = vmatpush.bf16.msra.mxu0 0
    %79 = vmatpush.bf16.msra.mxu0 %v70
    %80 = vmatmul.bf16.gmra.mxu0 %v63
    %v81 = vpop.f32.mrf.mxu0
    %v82 = vadd.f32 %v34, %v81
    %v83 = vpop.f32.mrf.mxu0
    %v84 = vadd.f32 %v39, %v83
    %85 = vmatmul.bf16.gmra.mxu0 %v66
    %v86 = vpop.f32.mrf.mxu0
    %v87 = vadd.f32 %v44, %v86
    %v88 = vpop.f32.mrf.mxu0
    %v89 = vadd.f32 %v49, %v88
    %90 = vdwg.mxu0
    %v91 = vmax.f32 %v82, 0.0
    %v92 = vmax.f32 %v84, 0.0
    %v93 = vmax.f32 %v87, 0.0
    %v94 = vmax.f32 %v89, 0.0
    %v95 = vld [vmem:[%s3] sm:$0xf]
    %v96 = vpack.c.bf16 %v92, %v91
    %v97 = vpack.c.bf16 %v94, %v93
    %v98 = vld [vmem:[%s4] sm:$0xff]
    %100 = vset.pattern.permute.xlu0 0
    %101 = vperm.xlu0 %100, %v98
    %v102 = vpop.permute.xlu0 %101
    %vm104 = vcmask 261120
    %v106 = vsel %vm104, %v95, 0
    %108 = vmatpush.bf16.msra.mxu0 0
    %109 = vmatpush.bf16.msra.mxu0 0
    %110 = vmatpush.bf16.msra.mxu0 0
    %111 = vmatpush.bf16.msra.mxu0 0
    %112 = vmatpush.bf16.msra.mxu0 0
    %113 = vmatpush.bf16.msra.mxu0 0
    %114 = vmatpush.bf16.msra.mxu0 %v97
    %115 = vmatpush.bf16.msra.mxu0 %v96
    %116 = vmatmul.bf16.gmra.mxu0 %v106
    %v117 = vpop.f32.mrf.mxu0
    %v118 = vadd.f32 %v102, %v117
    %v119 = vpop.f32.mrf.mxu0
    %120 = vdwg.mxu0
    %121 = vst [vmem:[#allocation2] sm:$0xff] %v118
    // Predicated region
    $region22: #{tpu_custom_call.1} parent=1 // pred_check
      _
    $region23: #{tpu_custom_call.1} parent=1 // pred_check_branch
      %123 = sbr.rel (0) target = $region25
    $region24: #{tpu_custom_call.1} parent=1 // pred_region
      %125 = vsyncadd [#allocation3], 0
      %s127 = sshll.u32 [#allocation2], 4
      %s128 = int_to_ptr.vmem [resolvable:$true] %s127
      %s129 = sshll.u32 %s5, 4
      %s130 = int_to_ptr.hbm [resolvable:$true] %s129
      %132 = dma.vmem_to_hbm [thread:$0]  %s128, 128, %s130, [#allocation3]
    $region25: #{tpu_custom_call.1} parent=1 // pred_fallthru
      _
    // Predicated region
    $region26: #{tpu_custom_call.1} parent=1 // pred_check
      _
    $region27: #{tpu_custom_call.1} parent=1 // pred_check_branch
      %134 = sbr.rel (0) target = $region29
    $region28: #{tpu_custom_call.1} parent=1 // pred_region
      %136 = dma.done [#allocation3], 128
    $region29: #{tpu_custom_call.1} parent=1 // pred_fallthru
      _
    %137 = vsyncpa [#allocation3], 1

</llo_original>
